<compile_context>
chip_gen: v7x
topology: tpu7x:2x2x1
jax: 0.10.0
libtpu: 0.0.40
codegen_flags: <defaults>
</compile_context>

<pallas_src>
import functools

import jax
import jax.numpy as jnp
from jax.experimental import pallas as pl
from jax.experimental.pallas import tpu as pltpu


# ---------------------------------------------------------------------------
# Tiling / compiler-parameter helpers
# ---------------------------------------------------------------------------

def _pick_tile(dim, target, align):
    """Largest tile <= target that divides `dim` and is a multiple of `align`.

    Falls back to the full dimension (no tiling along that axis) for toy shapes
    or when nothing aligned divides the dimension.
    """
    if dim <= target:
        return dim
    t = (target // align) * align
    while t >= align:
        if dim % t == 0:
            return t
        t -= align
    return dim


def _vmem_limit_bytes():
    # Leave headroom below physical VMEM (64 MiB/TC on v7x, 128 MiB on v5e/v6e).
    try:
        cap = getattr(pltpu.get_tpu_info(), "vmem_capacity_bytes", None)
        if cap:
            return int(min((cap * 3) // 4, 100 * 1024 * 1024))
    except Exception:
        pass
    return 48 * 1024 * 1024


def _plan_tiles(M, H, out_bytes, n_outputs, limit):
    """Pick (tm, tn, tk, full_k) given the VMEM budget.

    Prefers the full-K tiling (tk == H, no accumulator, no K grid axis); only
    falls back to a K-tiled accumulator layout when H is too large to fit a
    (tm, H) x-tile plus an (H, tn) w-tile double-buffered in VMEM.
    """
    def fullk_bytes(tm, tn):
        b = 2 * tm * H * 2                       # x tile, bf16, double-buffered
        b += 2 * H * tn * 2                      # w tile, bf16, double-buffered
        b += 2 * n_outputs * tm * tn * out_bytes  # output tile(s), double-buffered
        b += 2 * (tm * 4 + tn * 4)               # pos / act tiles (tiny)
        return b

    big_vmem = limit >= 80 * 1024 * 1024         # v5e / v6e class budget
    candidates = ([(512, 1024), (1024, 512), (512, 512)] if big_vmem
                  else [(512, 512)])
    candidates += [(256, 512), (256, 256), (128, 256), (128, 128)]
    for tm_t, tn_t in candidates:
        tm = _pick_tile(M, tm_t, 16)             # 16-row align: bf16 sublane packing
        tn = _pick_tile(H, tn_t, 128)
        if fullk_bytes(tm, tn) <= limit:
            return tm, tn, H, True

    # Fallback: K-tiled accumulator path for very large H.
    tm = _pick_tile(M, 256, 16)
    tn = _pick_tile(H, 256, 128)
    tk = _pick_tile(H, 512, 128)
    return tm, tn, tk, False


# ---------------------------------------------------------------------------
# Kernels
# ---------------------------------------------------------------------------

def _steered_fullk_kernel(aap_ref, pos_ref, x_ref, w_ref, act_ref,
                          block_ref, out_ref):
    # aap_ref:   SMEM (1,) int32     -- add_after_position (scalar prefetch)
    # pos_ref:   VMEM (tm, 1) int32  -- position_ids tile
    # x_ref:     VMEM (tm, H) bf16   -- block input tile (full reduction dim)
    # w_ref:     VMEM (H, tn) bf16   -- "block" weight tile
    # act_ref:   VMEM (1, tn) f32    -- activation_to_add (steering vector) tile
    # block_ref: VMEM (tm, tn)       -- raw block output (self.activations)
    # out_ref:   VMEM (tm, tn)       -- steered output
    h = jnp.dot(x_ref[...], w_ref[...], preferred_element_type=jnp.float32)
    block_ref[...] = h.astype(block_ref.dtype)
    act = act_ref[...].astype(jnp.float32)                       # (1, tn)
    mask = (pos_ref[...] > aap_ref[0]).astype(jnp.float32)       # (tm, 1)
    # Fused:  (h + mask*act) + act  ==  h + act * (1 + mask)
    out_ref[...] = (h + act * (1.0 + mask)).astype(out_ref.dtype)


def _steered_acc_kernel(aap_ref, pos_ref, x_ref, w_ref, act_ref,
                        block_ref, out_ref, acc_ref):
    # K-tiled fallback (grid axis 2 is the reduction); acc_ref: VMEM (tm, tn) f32.
    k = pl.program_id(2)

    @pl.when(k == 0)
    def _():
        acc_ref[...] = jnp.zeros_like(acc_ref)

    acc_ref[...] += jnp.dot(x_ref[...], w_ref[...],
                            preferred_element_type=jnp.float32)

    @pl.when(k == pl.num_programs(2) - 1)
    def _():
        h = acc_ref[...]
        block_ref[...] = h.astype(block_ref.dtype)
        act = act_ref[...].astype(jnp.float32)
        mask = (pos_ref[...] > aap_ref[0]).astype(jnp.float32)
        out_ref[...] = (h + act * (1.0 + mask)).astype(out_ref.dtype)


def _plain_fullk_kernel(x_ref, w_ref, out_ref):
    out_ref[...] = jnp.dot(x_ref[...], w_ref[...],
                           preferred_element_type=jnp.float32).astype(out_ref.dtype)


def _plain_acc_kernel(x_ref, w_ref, out_ref, acc_ref):
    k = pl.program_id(2)

    @pl.when(k == 0)
    def _():
        acc_ref[...] = jnp.zeros_like(acc_ref)

    acc_ref[...] += jnp.dot(x_ref[...], w_ref[...],
                            preferred_element_type=jnp.float32)

    @pl.when(k == pl.num_programs(2) - 1)
    def _():
        out_ref[...] = acc_ref[...].astype(out_ref.dtype)


# ---------------------------------------------------------------------------
# Functional entry points
# ---------------------------------------------------------------------------

@jax.jit
def steered_block_forward(x, w_bf16, activation_f32, position_ids, add_after_position):
    """Block (linear projection) + steering in one tiled Pallas kernel.

    x: [B, S, H]; w_bf16: [H, H] (pre-cast); activation_f32: [H];
    position_ids: [B, S] int32; add_after_position: scalar int32.
    Returns (block_output, steered_output), both [B, S, H] in x.dtype.
    """
    B, S, H = x.shape
    M = B * S
    x2 = x.reshape(M, H).astype(jnp.bfloat16)      # MXU inputs bf16, f32 accumulate
    pos = position_ids.astype(jnp.int32).reshape(M, 1)
    aap = jnp.asarray(add_after_position, jnp.int32).reshape((1,))
    act = activation_f32.astype(jnp.float32).reshape(1, H)

    out_bytes = jnp.dtype(x.dtype).itemsize
    limit = _vmem_limit_bytes()
    tm, tn, tk, full_k = _plan_tiles(M, H, out_bytes, n_outputs=2, limit=limit)

    out_shape = (
        jax.ShapeDtypeStruct((M, H), x.dtype),     # raw block output (self.activations)
        jax.ShapeDtypeStruct((M, H), x.dtype),     # steered output
    )

    if full_k:
        grid_spec = pltpu.PrefetchScalarGridSpec(
            num_scalar_prefetch=1,
            grid=(M // tm, H // tn),
            in_specs=[
                pl.BlockSpec((tm, 1), lambda i, j, aap_ref: (i, 0)),   # position_ids
                pl.BlockSpec((tm, H), lambda i, j, aap_ref: (i, 0)),   # x (bf16)
                pl.BlockSpec((H, tn), lambda i, j, aap_ref: (0, j)),   # W (bf16)
                pl.BlockSpec((1, tn), lambda i, j, aap_ref: (0, j)),   # steering vec
            ],
            out_specs=[
                pl.BlockSpec((tm, tn), lambda i, j, aap_ref: (i, j)),
                pl.BlockSpec((tm, tn), lambda i, j, aap_ref: (i, j)),
            ],
        )
        kernel = _steered_fullk_kernel
        semantics = ("parallel", "parallel")
    else:
        grid_spec = pltpu.PrefetchScalarGridSpec(
            num_scalar_prefetch=1,
            grid=(M // tm, H // tn, H // tk),
            in_specs=[
                pl.BlockSpec((tm, 1), lambda i, j, k, aap_ref: (i, 0)),
                pl.BlockSpec((tm, tk), lambda i, j, k, aap_ref: (i, k)),
                pl.BlockSpec((tk, tn), lambda i, j, k, aap_ref: (k, j)),
                pl.BlockSpec((1, tn), lambda i, j, k, aap_ref: (0, j)),
            ],
            out_specs=[
                pl.BlockSpec((tm, tn), lambda i, j, k, aap_ref: (i, j)),
                pl.BlockSpec((tm, tn), lambda i, j, k, aap_ref: (i, j)),
            ],
            scratch_shapes=[pltpu.VMEM((tm, tn), jnp.float32)],
        )
        kernel = _steered_acc_kernel
        semantics = ("parallel", "parallel", "arbitrary")

    block_out, steered = pl.pallas_call(
        kernel,
        out_shape=out_shape,
        grid_spec=grid_spec,
        compiler_params=pltpu.CompilerParams(
            dimension_semantics=semantics,
            vmem_limit_bytes=limit,
        ),
    )(aap, pos, x2, w_bf16, act)

    return block_out.reshape(B, S, H), steered.reshape(B, S, H)


@jax.jit
def block_only_forward(x, w_bf16):
    """Matmul-only path (activation_to_add is None): single output, less HBM traffic."""
    B, S, H = x.shape
    M = B * S
    x2 = x.reshape(M, H).astype(jnp.bfloat16)

    out_bytes = jnp.dtype(x.dtype).itemsize
    limit = _vmem_limit_bytes()
    tm, tn, tk, full_k = _plan_tiles(M, H, out_bytes, n_outputs=1, limit=limit)

    if full_k:
        grid_spec = pltpu.PrefetchScalarGridSpec(
            num_scalar_prefetch=0,
            grid=(M // tm, H // tn),
            in_specs=[
                pl.BlockSpec((tm, H), lambda i, j: (i, 0)),
                pl.BlockSpec((H, tn), lambda i, j: (0, j)),
            ],
            out_specs=pl.BlockSpec((tm, tn), lambda i, j: (i, j)),
        )
        kernel = _plain_fullk_kernel
        semantics = ("parallel", "parallel")
    else:
        grid_spec = pltpu.PrefetchScalarGridSpec(
            num_scalar_prefetch=0,
            grid=(M // tm, H // tn, H // tk),
            in_specs=[
                pl.BlockSpec((tm, tk), lambda i, j, k: (i, k)),
                pl.BlockSpec((tk, tn), lambda i, j, k: (k, j)),
            ],
            out_specs=pl.BlockSpec((tm, tn), lambda i, j, k: (i, j)),
            scratch_shapes=[pltpu.VMEM((tm, tn), jnp.float32)],
        )
        kernel = _plain_acc_kernel
        semantics = ("parallel", "parallel", "arbitrary")

    out = pl.pallas_call(
        kernel,
        out_shape=jax.ShapeDtypeStruct((M, H), x.dtype),
        grid_spec=grid_spec,
        compiler_params=pltpu.CompilerParams(
            dimension_semantics=semantics,
            vmem_limit_bytes=limit,
        ),
    )(x2, w_bf16)
    return out.reshape(B, S, H)


# ---------------------------------------------------------------------------
# Stateful wrapper mirroring the PyTorch module
# ---------------------------------------------------------------------------

class BlockOutputWrapper:
    """JAX analogue of the PyTorch BlockOutputWrapper (stateful steering wrapper)."""
    # TODO(synk): the wrapped arbitrary transformer `block` (and the tokenizer) have no
    # clean Pallas equivalent; the block is modeled here as a single linear projection.

    def __init__(self, w):
        self.w = w
        self.w_bf16 = jnp.asarray(w, jnp.bfloat16)   # cast ONCE, not per forward call
        self.activations = None
        self.activation_to_add = None
        self._activation_f32 = None
        self.add_after_position = None

    def set_activation_to_add(self, activation_to_add):
        self.activation_to_add = activation_to_add
        self._activation_f32 = jnp.asarray(activation_to_add, jnp.float32).reshape(-1)

    def reset(self):
        self.activation_to_add = None
        self._activation_f32 = None
        self.activations = None
        self.add_after_position = None

    def forward(self, x, position_ids):
        B, S, H = x.shape
        pos = jnp.asarray(position_ids, jnp.int32)
        if pos.ndim == 1:                              # tolerate HF-style 1-D position_ids
            pos = jnp.broadcast_to(pos[None, :], (B, S))

        if self.activation_to_add is None:
            block_out = block_only_forward(x, self.w_bf16)
            self.activations = block_out
            return (block_out,)

        if self.add_after_position is None:
            # mirrors `position_ids.min().item() - 1`, but stays on-device (no host sync)
            self.add_after_position = jnp.min(pos).astype(jnp.int32) - 1

        block_out, steered = steered_block_forward(
            x, self.w_bf16, self._activation_f32, pos, self.add_after_position)
        self.activations = block_out
        return (steered,)


# ---------------------------------------------------------------------------
# Self-test
# ---------------------------------------------------------------------------

if __name__ == "__main__":
    key = jax.random.PRNGKey(0)
    # Small but lane-dense / tileable shapes (H multiple of 128, B*S multiple of 16)
    # so the flattened-M tiling path is actually exercised.
    B, S, H = 2, 16, 256
    kx, kw, ka = jax.random.split(key, 3)

    x = jax.random.normal(kx, (B, S, H), jnp.float32)
    w = (jax.random.normal(kw, (H, H), jnp.float32) / jnp.sqrt(H)).astype(jnp.float32)
    act_to_add = jax.random.normal(ka, (H,), jnp.float32)
    position_ids = jnp.broadcast_to(jnp.arange(S, dtype=jnp.int32)[None, :], (B, S))

    # --- steered path --------------------------------------------------------
    wrapper = BlockOutputWrapper(w)
    wrapper.set_activation_to_add(act_to_add)
    (out,) = wrapper.forward(x, position_ids)
    out = jax.block_until_ready(out)

    # Pure-JAX reference using the same bf16-input / f32-accumulate matmul numerics.
    h_ref = jnp.einsum("bsh,hd->bsd",
                       x.astype(jnp.bfloat16), w.astype(jnp.bfloat16),
                       preferred_element_type=jnp.float32).astype(x.dtype)
    aap_ref = jnp.min(position_ids) - 1
    mask_ref = (position_ids > aap_ref)[..., None].astype(jnp.float32)
    ref = h_ref + mask_ref * act_to_add[None, None, :] + act_to_add[None, None, :]

    assert out.shape == (B, S, H)
    assert jnp.allclose(out, ref, atol=1e-3, rtol=1e-3), float(jnp.max(jnp.abs(out - ref)))
    assert jnp.allclose(wrapper.activations, h_ref, atol=1e-3, rtol=1e-3)

    # --- no-steer path (single-output matmul-only kernel) --------------------
    wrapper.reset()
    (plain,) = wrapper.forward(x, position_ids)
    plain = jax.block_until_ready(plain)
    assert jnp.allclose(plain, h_ref, atol=1e-3, rtol=1e-3)

    # --- 1-D position_ids robustness ------------------------------------------
    wrapper.set_activation_to_add(act_to_add)
    (out1d,) = wrapper.forward(x, jnp.arange(S, dtype=jnp.int32))
    out1d = jax.block_until_ready(out1d)
    assert jnp.allclose(out1d, ref, atol=1e-3, rtol=1e-3)

    print("KERNEL_OK")
</pallas_src>

<mosaic_0001>
module attributes {stable_mosaic.version = 11 : i64} {
  func.func @_steered_fullk_kernel(%arg0: i32, %arg1: i32, %arg2: memref<1xi32, #tpu.memory_space<smem>>, %arg3: memref<32x1xi32, #tpu.memory_space<vmem>>, %arg4: memref<32x256xbf16, #tpu.memory_space<vmem>>, %arg5: memref<256x256xbf16, #tpu.memory_space<vmem>>, %arg6: memref<1x256xf32, #tpu.memory_space<vmem>>, %arg7: memref<32x256xf32, #tpu.memory_space<vmem>>, %arg8: memref<32x256xf32, #tpu.memory_space<vmem>>) attributes {dimension_semantics = [#tpu.dimension_semantics<parallel>, #tpu.dimension_semantics<parallel>], iteration_bounds = array<i64: 1, 1>, scalar_prefetch = 1 : i64, scratch_operands = 0 : i64, tpu.core_type = #tpu.core_type<tc>, window_params = [{transform_indices = @transform_0, window_bounds = array<i64: 32, 1>}, {transform_indices = @transform_1, window_bounds = array<i64: 32, 256>}, {transform_indices = @transform_2, window_bounds = array<i64: 256, 256>}, {transform_indices = @transform_3, window_bounds = array<i64: 1, 256>}, {transform_indices = @transform_4, window_bounds = array<i64: 32, 256>}, {transform_indices = @transform_5, window_bounds = array<i64: 32, 256>}]} {
    %c0 = arith.constant 0 : index
    %c0_0 = arith.constant 0 : index
    %0 = vector.load %arg4[%c0, %c0_0] : memref<32x256xbf16, #tpu.memory_space<vmem>>, vector<32x256xbf16>
    %c0_1 = arith.constant 0 : index
    %c0_2 = arith.constant 0 : index
    %1 = vector.load %arg5[%c0_1, %c0_2] : memref<256x256xbf16, #tpu.memory_space<vmem>>, vector<256x256xbf16>
    %cst = arith.constant dense<0.000000e+00> : vector<32x256xf32>
    %2 = tpu.matmul %0, %1, %cst {dimension_numbers = #tpu.dot_dimension_numbers<[1], [0], [0], [1], [0, 0, 1, 1], [], []>} : vector<32x256xbf16>, vector<256x256xbf16>, vector<32x256xf32> -> vector<32x256xf32>
    %c0_3 = arith.constant 0 : index
    %c0_4 = arith.constant 0 : index
    %3 = vector.load %arg7[%c0_3, %c0_4] : memref<32x256xf32, #tpu.memory_space<vmem>>, vector<32x256xf32>
    tpu.vector_store %arg7[%c0_3, %c0_4], %2 {strides = array<i32>} : memref<32x256xf32, #tpu.memory_space<vmem>>, vector<32x256xf32>,
    %c0_5 = arith.constant 0 : index
    %c0_6 = arith.constant 0 : index
    %4 = vector.load %arg6[%c0_5, %c0_6] : memref<1x256xf32, #tpu.memory_space<vmem>>, vector<1x256xf32>
    %c0_7 = arith.constant 0 : index
    %c0_8 = arith.constant 0 : index
    %5 = vector.load %arg3[%c0_7, %c0_8] : memref<32x1xi32, #tpu.memory_space<vmem>>, vector<32x1xi32>
    %c0_9 = arith.constant 0 : index
    %6 = memref.load %arg2[%c0_9] : memref<1xi32, #tpu.memory_space<smem>>
    %7 = vector.broadcast %6 : i32 to vector<32x1xi32>
    %8 = arith.cmpi sgt, %5, %7 : vector<32x1xi32>
    %9 = arith.extui %8 : vector<32x1xi1> to vector<32x1xi32>
    %10 = arith.sitofp %9 : vector<32x1xi32> to vector<32x1xf32>
    %cst_10 = arith.constant 1.000000e+00 : f32
    %11 = vector.broadcast %cst_10 : f32 to vector<32x1xf32>
    %12 = arith.addf %11, %10 : vector<32x1xf32>
    %13 = vector.broadcast %4 : vector<1x256xf32> to vector<32x256xf32>
    %14 = vector.broadcast %12 : vector<32x1xf32> to vector<32x256xf32>
    %15 = arith.mulf %13, %14 : vector<32x256xf32>
    %16 = arith.addf %2, %15 : vector<32x256xf32>
    %c0_11 = arith.constant 0 : index
    %c0_12 = arith.constant 0 : index
    %17 = vector.load %arg8[%c0_11, %c0_12] : memref<32x256xf32, #tpu.memory_space<vmem>>, vector<32x256xf32>
    tpu.vector_store %arg8[%c0_11, %c0_12], %16 {strides = array<i32>} : memref<32x256xf32, #tpu.memory_space<vmem>>, vector<32x256xf32>,
    return
  }
  func.func @transform_0(%arg0: i32, %arg1: i32, %arg2: memref<1xi32, #tpu.memory_space<smem>>) -> (i32, i32) {
    %c0_i32 = arith.constant 0 : i32
    %c0_i32_0 = arith.constant 0 : i32
    return %arg0, %c0_i32 : i32, i32
  }
  func.func @transform_1(%arg0: i32, %arg1: i32, %arg2: memref<1xi32, #tpu.memory_space<smem>>) -> (i32, i32) {
    %c0_i32 = arith.constant 0 : i32
    %c0_i32_0 = arith.constant 0 : i32
    return %arg0, %c0_i32 : i32, i32
  }
  func.func @transform_2(%arg0: i32, %arg1: i32, %arg2: memref<1xi32, #tpu.memory_space<smem>>) -> (i32, i32) {
    %c0_i32 = arith.constant 0 : i32
    %c0_i32_0 = arith.constant 0 : i32
    return %c0_i32, %arg1 : i32, i32
  }
  func.func @transform_3(%arg0: i32, %arg1: i32, %arg2: memref<1xi32, #tpu.memory_space<smem>>) -> (i32, i32) {
    %c0_i32 = arith.constant 0 : i32
    %c0_i32_0 = arith.constant 0 : i32
    return %c0_i32, %arg1 : i32, i32
  }
  func.func @transform_4(%arg0: i32, %arg1: i32, %arg2: memref<1xi32, #tpu.memory_space<smem>>) -> (i32, i32) {
    %c0_i32 = arith.constant 0 : i32
    return %arg0, %arg1 : i32, i32
  }
  func.func @transform_5(%arg0: i32, %arg1: i32, %arg2: memref<1xi32, #tpu.memory_space<smem>>) -> (i32, i32) {
    %c0_i32 = arith.constant 0 : i32
    return %arg0, %arg1 : i32, i32
  }
}

</mosaic_0001>

<llo_original>
// kernel: steered_block_forward.1
$region0: #{steered_block_forward.1}
  #allocation0 [shape = 'u32[]', space=smem, size = 0x4, offset = 0x4, fixed_abs, tag = 'smem constant byte address 0x4 - core index']
  #allocation1 [shape = 'u32[144,128]{1,0:T(1,128)}', space=vmem, size = 0x12000, scoped, tag = 'internal scratch']
  #allocation2 [shape = 's32[1]{0}', space=sflag, size = 0x4, scoped, tag = 'scoped memory for steered_block_forward.1']
  #allocation3 [shape = 's32[1]{0:T(128)S(6)}', space=smem, size = 0x200, scoped, tag = 'prefetched SMEM operand 0']
  %s0 = inlined_call_operand.<no memory space> [shape: s32[1], index: 0, kind: input, shape index: {}]
  %s1 = inlined_call_operand.vmem [shape: s32[32,1], index: 1, kind: input, shape index: {}]
  %s2 = inlined_call_operand.vmem [shape: bf16[32,256], index: 2, kind: input, shape index: {}]
  %s3 = inlined_call_operand.hbm [shape: bf16[256,256], index: 3, kind: input, shape index: {}]
  %s4 = inlined_call_operand.vmem [shape: f32[1,256], index: 4, kind: input, shape index: {}]
  %s5 = inlined_call_operand.hbm [shape: f32[32,256], index: 5, kind: output, shape index: {0}]
  %s6 = inlined_call_operand.hbm [shape: f32[32,256], index: 6, kind: output, shape index: {1}]
  %7 = xla_tuple %s5, %s6
  %s8 = sld [smem:[#allocation0]]
  $region38: #{steered_block_forward.1} parent=0
    _
  %s10 = ssub.s32 1, %s8
  %s11 = scalar_select 0, %s10, %s8
  %12 = sst [smem:[#allocation3]] %s0
  $region1: #{steered_block_forward.1} parent=0
    #allocation4 [shape = 'u8[131072]{0}', space=vmem, size = 0x20000, scoped, tag = 'input window, operand 3, single buffered']
    #allocation5 [shape = 's32[1]{0}', space=sflag, size = 0x4, scoped, tag = 'scoped memory for steered_block_forward.1']
    #allocation6 [shape = 's32[1]{0}', space=sflag, size = 0x4, scoped, tag = 'scoped memory for steered_block_forward.1']
    #allocation7 [shape = 'u8[32768]{0}', space=vmem, size = 0x8000, scoped, tag = 'output window, operand 0, single buffered']
    #allocation8 [shape = 'u8[32768]{0}', space=vmem, size = 0x8000, scoped, tag = 'output window, operand 1, single buffered']
    #allocation9 [shape = 's32[1]{0}', space=sflag, size = 0x4, scoped, tag = 'scoped memory for steered_block_forward.1']
    %13 = vsyncpa [#allocation5], 0
    %14 = vsyncpa [#allocation6], 0
    %15 = vsyncpa [#allocation9], 0
    // Predicated region
    $region2: #{steered_block_forward.1} parent=1 // pred_check
      _
    $region3: #{steered_block_forward.1} parent=1 // pred_check_branch
      %17 = sbr.rel (0) target = $region5
    $region4: #{steered_block_forward.1} parent=1 // pred_region
      _
    $region5: #{steered_block_forward.1} parent=1 // pred_fallthru
      _
    // Predicated region
    $region6: #{steered_block_forward.1} parent=1 // pred_check
      _
    $region7: #{steered_block_forward.1} parent=1 // pred_check_branch
      %19 = sbr.rel (0) target = $region9
    $region8: #{steered_block_forward.1} parent=1 // pred_region
      _
    $region9: #{steered_block_forward.1} parent=1 // pred_fallthru
      _
    // Predicated region
    $region10: #{steered_block_forward.1} parent=1 // pred_check
      _
    $region11: #{steered_block_forward.1} parent=1 // pred_check_branch
      %21 = sbr.rel (0) target = $region13
    $region12: #{steered_block_forward.1} parent=1 // pred_region
      %s23 = ssub.s32 4096, 4096
      %24 = vsyncadd [#allocation5], %s23
      %s25 = sshll.u32 [#allocation4], 4
      %s26 = int_to_ptr.vmem [resolvable:$true] %s25
      %31 = dma.hbm_to_vmem [thread:$0]  %s3, 4096, %s26, [#allocation5], 128, 128, 8
    $region13: #{steered_block_forward.1} parent=1 // pred_fallthru
      _
    // Predicated region
    $region14: #{steered_block_forward.1} parent=1 // pred_check
      _
    $region15: #{steered_block_forward.1} parent=1 // pred_check_branch
      %33 = sbr.rel (0) target = $region17
    $region16: #{steered_block_forward.1} parent=1 // pred_region
      _
    $region17: #{steered_block_forward.1} parent=1 // pred_fallthru
      _
    // Predicated region
    $region18: #{steered_block_forward.1} parent=1 // pred_check
      _
    $region19: #{steered_block_forward.1} parent=1 // pred_check_branch
      %35 = sbr.rel (0) target = $region21
    $region20: #{steered_block_forward.1} parent=1 // pred_region
      %36 = dma.done [#allocation5], 4096
    $region21: #{steered_block_forward.1} parent=1 // pred_fallthru
      _
    %v37 = vld [vmem:[%s2] sm:$0xff]
    %v38 = vld [vmem:[%s2 + $0x8] sm:$0xff]
    %v39 = vld [vmem:[%s2 + $0x10] sm:$0xff]
    %v40 = vld [vmem:[%s2 + $0x18] sm:$0xff]
    %v41 = vld [vmem:[#allocation4] sm:$0xff]
    %v42 = vld [vmem:[#allocation4 + $0x8] sm:$0xff]
    %v43 = vld [vmem:[#allocation4 + $0x10] sm:$0xff]
    %v44 = vld [vmem:[#allocation4 + $0x18] sm:$0xff]
    %v45 = vld [vmem:[#allocation4 + $0x20] sm:$0xff]
    %v46 = vld [vmem:[#allocation4 + $0x28] sm:$0xff]
    %v47 = vld [vmem:[#allocation4 + $0x30] sm:$0xff]
    %v48 = vld [vmem:[#allocation4 + $0x38] sm:$0xff]
    %v49 = vld [vmem:[#allocation4 + $0x40] sm:$0xff]
    %v50 = vld [vmem:[#allocation4 + $0x48] sm:$0xff]
    %v51 = vld [vmem:[#allocation4 + $0x50] sm:$0xff]
    %v52 = vld [vmem:[#allocation4 + $0x58] sm:$0xff]
    %v53 = vld [vmem:[#allocation4 + $0x60] sm:$0xff]
    %v54 = vld [vmem:[#allocation4 + $0x68] sm:$0xff]
    %v55 = vld [vmem:[#allocation4 + $0x70] sm:$0xff]
    %v56 = vld [vmem:[#allocation4 + $0x78] sm:$0xff]
    %v57 = vld [vmem:[#allocation4 + $0x80] sm:$0xff]
    %v58 = vld [vmem:[#allocation4 + $0x88] sm:$0xff]
    %v59 = vld [vmem:[#allocation4 + $0x90] sm:$0xff]
    %v60 = vld [vmem:[#allocation4 + $0x98] sm:$0xff]
    %v61 = vld [vmem:[#allocation4 + $0xa0] sm:$0xff]
    %v62 = vld [vmem:[#allocation4 + $0xa8] sm:$0xff]
    %v63 = vld [vmem:[#allocation4 + $0xb0] sm:$0xff]
    %v64 = vld [vmem:[#allocation4 + $0xb8] sm:$0xff]
    %v65 = vld [vmem:[#allocation4 + $0xc0] sm:$0xff]
    %v66 = vld [vmem:[#allocation4 + $0xc8] sm:$0xff]
    %v67 = vld [vmem:[#allocation4 + $0xd0] sm:$0xff]
    %v68 = vld [vmem:[#allocation4 + $0xd8] sm:$0xff]
    %v69 = vld [vmem:[#allocation4 + $0xe0] sm:$0xff]
    %v70 = vld [vmem:[#allocation4 + $0xe8] sm:$0xff]
    %v71 = vld [vmem:[#allocation4 + $0xf0] sm:$0xff]
    %v72 = vld [vmem:[#allocation4 + $0xf8] sm:$0xff]
    %v77 = vunpack.c.l.b16 %v37
    %v78 = vunpack.c.h.b16 %v37
    %v79 = vunpack.c.l.b16 %v38
    %v80 = vunpack.c.h.b16 %v38
    %v81 = vunpack.c.l.b16 %v39
    %v82 = vunpack.c.h.b16 %v39
    %v83 = vunpack.c.l.b16 %v40
    %v84 = vunpack.c.h.b16 %v40
    %v85 = vpack.c.b16 %v79, %v77
    %v86 = vpack.c.b16 %v80, %v78
    %v87 = vpack.c.b16 %v83, %v81
    %v88 = vpack.c.b16 %v84, %v82
    %v125 = vunpack.c.l.b16 %v41
    %v126 = vunpack.c.h.b16 %v41
    %v127 = vunpack.c.l.b16 %v42
    %v128 = vunpack.c.h.b16 %v42
    %v129 = vunpack.c.l.b16 %v43
    %v130 = vunpack.c.h.b16 %v43
    %v131 = vunpack.c.l.b16 %v44
    %v132 = vunpack.c.h.b16 %v44
    %v133 = vunpack.c.l.b16 %v45
    %v134 = vunpack.c.h.b16 %v45
    %v135 = vunpack.c.l.b16 %v46
    %v136 = vunpack.c.h.b16 %v46
    %v137 = vunpack.c.l.b16 %v47
    %v138 = vunpack.c.h.b16 %v47
    %v139 = vunpack.c.l.b16 %v48
    %v140 = vunpack.c.h.b16 %v48
    %v141 = vunpack.c.l.b16 %v49
    %v142 = vunpack.c.h.b16 %v49
    %v143 = vunpack.c.l.b16 %v50
    %v144 = vunpack.c.h.b16 %v50
    %v145 = vunpack.c.l.b16 %v51
    %v146 = vunpack.c.h.b16 %v51
    %v147 = vunpack.c.l.b16 %v52
    %v148 = vunpack.c.h.b16 %v52
    %v149 = vunpack.c.l.b16 %v53
    %v150 = vunpack.c.h.b16 %v53
    %v151 = vunpack.c.l.b16 %v54
    %v152 = vunpack.c.h.b16 %v54
    %v153 = vunpack.c.l.b16 %v55
    %v154 = vunpack.c.h.b16 %v55
    %v155 = vunpack.c.l.b16 %v56
    %v156 = vunpack.c.h.b16 %v56
    %v157 = vunpack.c.l.b16 %v57
    %v158 = vunpack.c.h.b16 %v57
    %v159 = vunpack.c.l.b16 %v58
    %v160 = vunpack.c.h.b16 %v58
    %v161 = vunpack.c.l.b16 %v59
    %v162 = vunpack.c.h.b16 %v59
    %v163 = vunpack.c.l.b16 %v60
    %v164 = vunpack.c.h.b16 %v60
    %v165 = vunpack.c.l.b16 %v61
    %v166 = vunpack.c.h.b16 %v61
    %v167 = vunpack.c.l.b16 %v62
    %v168 = vunpack.c.h.b16 %v62
    %v169 = vunpack.c.l.b16 %v63
    %v170 = vunpack.c.h.b16 %v63
    %v171 = vunpack.c.l.b16 %v64
    %v172 = vunpack.c.h.b16 %v64
    %v173 = vunpack.c.l.b16 %v65
    %v174 = vunpack.c.h.b16 %v65
    %v175 = vunpack.c.l.b16 %v66
    %v176 = vunpack.c.h.b16 %v66
    %v177 = vunpack.c.l.b16 %v67
    %v178 = vunpack.c.h.b16 %v67
    %v179 = vunpack.c.l.b16 %v68
    %v180 = vunpack.c.h.b16 %v68
    %v181 = vunpack.c.l.b16 %v69
    %v182 = vunpack.c.h.b16 %v69
    %v183 = vunpack.c.l.b16 %v70
    %v184 = vunpack.c.h.b16 %v70
    %v185 = vunpack.c.l.b16 %v71
    %v186 = vunpack.c.h.b16 %v71
    %v187 = vunpack.c.l.b16 %v72
    %v188 = vunpack.c.h.b16 %v72
    %v189 = vpack.c.b16 %v127, %v125
    %v190 = vpack.c.b16 %v128, %v126
    %v191 = vpack.c.b16 %v131, %v129
    %v192 = vpack.c.b16 %v132, %v130
    %v193 = vpack.c.b16 %v135, %v133
    %v194 = vpack.c.b16 %v136, %v134
    %v195 = vpack.c.b16 %v139, %v137
    %v196 = vpack.c.b16 %v140, %v138
    %v197 = vpack.c.b16 %v143, %v141
    %v198 = vpack.c.b16 %v144, %v142
    %v199 = vpack.c.b16 %v147, %v145
    %v200 = vpack.c.b16 %v148, %v146
    %v201 = vpack.c.b16 %v151, %v149
    %v202 = vpack.c.b16 %v152, %v150
    %v203 = vpack.c.b16 %v155, %v153
    %v204 = vpack.c.b16 %v156, %v154
    %v205 = vpack.c.b16 %v159, %v157
    %v206 = vpack.c.b16 %v160, %v158
    %v207 = vpack.c.b16 %v163, %v161
    %v208 = vpack.c.b16 %v164, %v162
    %v209 = vpack.c.b16 %v167, %v165
    %v210 = vpack.c.b16 %v168, %v166
    %v211 = vpack.c.b16 %v171, %v169
    %v212 = vpack.c.b16 %v172, %v170
    %v213 = vpack.c.b16 %v175, %v173
    %v214 = vpack.c.b16 %v176, %v174
    %v215 = vpack.c.b16 %v179, %v177
    %v216 = vpack.c.b16 %v180, %v178
    %v217 = vpack.c.b16 %v183, %v181
    %v218 = vpack.c.b16 %v184, %v182
    %v219 = vpack.c.b16 %v187, %v185
    %v220 = vpack.c.b16 %v188, %v186
    %253 = vmatprep.subr.bf16.mxu0 %v190
    %254 = vmatpush1.bf16.msra.mxu0 %v189
    %255 = vmatprep.subr.bf16.mxu0 %v192
    %256 = vmatpush1.bf16.msra.mxu0 %v191
    %257 = vmatprep.subr.bf16.mxu0 %v194
    %258 = vmatpush1.bf16.msra.mxu0 %v193
    %259 = vmatprep.subr.bf16.mxu0 %v196
    %260 = vmatpush1.bf16.msra.mxu0 %v195
    %261 = vmatprep.subr.bf16.mxu0 %v198
    %262 = vmatpush1.bf16.msra.mxu0 %v197
    %263 = vmatprep.subr.bf16.mxu0 %v200
    %264 = vmatpush1.bf16.msra.mxu0 %v199
    %265 = vmatprep.subr.bf16.mxu0 %v202
    %266 = vmatpush1.bf16.msra.mxu0 %v201
    %267 = vmatprep.subr.bf16.mxu0 %v204
    %268 = vmatpush1.bf16.msra.mxu0 %v203
    %269 = vmatprep.subr.bf16.mxu0 %v206
    %270 = vmatpush1.bf16.msra.mxu0 %v205
    %271 = vmatprep.subr.bf16.mxu0 %v208
    %272 = vmatpush1.bf16.msra.mxu0 %v207
    %273 = vmatprep.subr.bf16.mxu0 %v210
    %274 = vmatpush1.bf16.msra.mxu0 %v209
    %275 = vmatprep.subr.bf16.mxu0 %v212
    %276 = vmatpush1.bf16.msra.mxu0 %v211
    %277 = vmatprep.subr.bf16.mxu0 %v214
    %278 = vmatpush1.bf16.msra.mxu0 %v213
    %279 = vmatprep.subr.bf16.mxu0 %v216
    %280 = vmatpush1.bf16.msra.mxu0 %v215
    %281 = vmatprep.subr.bf16.mxu0 %v218
    %282 = vmatpush1.bf16.msra.mxu0 %v217
    %283 = vmatprep.subr.bf16.mxu0 %v220
    %284 = vmatpush1.bf16.msra.mxu0 %v219
    %285 = vmatprep.mubr.bf16.mxu0 %v86
    %286 = vmatmul.mubr.bf16.gmra.mrb[0].mxu0 %v85
    %v287 = vpop.f32.mrb[0].mxu0
    %v288 = vadd.f32 0.0, %v287
    %v289 = vpop.f32.mrb[0].mxu0
    %v290 = vadd.f32 0.0, %v289
    %v291 = vpop.f32.mrb[0].mxu0
    %v292 = vadd.f32 0.0, %v291
    %v293 = vpop.f32.mrb[0].mxu0
    %v294 = vadd.f32 0.0, %v293
    %295 = vmatprep.mubr.bf16.mxu0 %v88
    %296 = vmatmul.mubr.bf16.gmra.mrb[0].mxu0 %v87
    %v297 = vpop.f32.mrb[0].mxu0
    %v298 = vadd.f32 0.0, %v297
    %v299 = vpop.f32.mrb[0].mxu0
    %v300 = vadd.f32 0.0, %v299
    %v301 = vpop.f32.mrb[0].mxu0
    %v302 = vadd.f32 0.0, %v301
    %v303 = vpop.f32.mrb[0].mxu0
    %v304 = vadd.f32 0.0, %v303
    %305 = vdwg.mxu0
    %306 = vst [vmem:[#allocation7] sm:$0xff] %v288
    %307 = vst [vmem:[#allocation7 + $0x8] sm:$0xff] %v290
    %308 = vst [vmem:[#allocation7 + $0x10] sm:$0xff] %v292
    %309 = vst [vmem:[#allocation7 + $0x18] sm:$0xff] %v294
    %310 = vst [vmem:[#allocation7 + $0x20] sm:$0xff] %v298
    %311 = vst [vmem:[#allocation7 + $0x28] sm:$0xff] %v300
    %312 = vst [vmem:[#allocation7 + $0x30] sm:$0xff] %v302
    %313 = vst [vmem:[#allocation7 + $0x38] sm:$0xff] %v304
    %v314 = vld [vmem:[%s4] sm:$0x3]
    %v315 = vld [vmem:[%s1] sm:$0xff]
    %v316 = vld [vmem:[%s1 + $0x8] sm:$0xff]
    %v317 = vld [vmem:[%s1 + $0x10] sm:$0xff]
    %v318 = vld [vmem:[%s1 + $0x18] sm:$0xff]
    %s319 = sld [smem:[#allocation3]]
    %v320 = vstv %s319
    %vm321 = vcmp.gt.s32.totalorder %v315, %v320
    %vm322 = vcmp.gt.s32.totalorder %v316, %v320
    %vm323 = vcmp.gt.s32.totalorder %v317, %v320
    %vm324 = vcmp.gt.s32.totalorder %v318, %v320
    %v325 = vsel %vm321, 1, 0
    %v326 = vsel %vm322, 1, 0
    %v327 = vsel %vm323, 1, 0
    %v328 = vsel %vm324, 1, 0
    %v329 = vcvt.s32.f32 %v325
    %v330 = vcvt.s32.f32 %v326
    %v331 = vcvt.s32.f32 %v327
    %v332 = vcvt.s32.f32 %v328
    %v333 = vadd.f32 %v329, 1.0
    %v334 = vadd.f32 %v330, 1.0
    %v335 = vadd.f32 %v331, 1.0
    %v336 = vadd.f32 %v332, 1.0
    %v338 = vlaneseq
    %v339 = vshrl.u32 %v338, 7
    %v340 = vsub.s32 0, %v339
    %v341 = vrot.slane %v314, %v340
    %v342 = vlaneseq
    %v343 = vshrl.u32 %v342, 7
    %v344 = vsub.s32 1, %v343
    %v345 = vrot.slane %v314, %v344
    %349 = vset.pattern.permute.xlu0 0
    %350 = vperm.xlu0 %349, %v333
    %v351 = vpop.permute.xlu0 %350
    %354 = vset.pattern.permute.xlu0 0
    %355 = vperm.xlu0 %354, %v334
    %v356 = vpop.permute.xlu0 %355
    %359 = vset.pattern.permute.xlu0 0
    %360 = vperm.xlu0 %359, %v335
    %v361 = vpop.permute.xlu0 %360
    %364 = vset.pattern.permute.xlu0 0
    %365 = vperm.xlu0 %364, %v336
    %v366 = vpop.permute.xlu0 %365
    %v368 = vmul.f32 %v341, %v351
    %v369 = vmul.f32 %v345, %v351
    %v370 = vmul.f32 %v341, %v356
    %v371 = vmul.f32 %v345, %v356
    %v372 = vmul.f32 %v341, %v361
    %v373 = vmul.f32 %v345, %v361
    %v374 = vmul.f32 %v341, %v366
    %v375 = vmul.f32 %v345, %v366
    %v376 = vadd.f32 %v288, %v368
    %v377 = vadd.f32 %v290, %v369
    %v378 = vadd.f32 %v292, %v370
    %v379 = vadd.f32 %v294, %v371
    %v380 = vadd.f32 %v298, %v372
    %v381 = vadd.f32 %v300, %v373
    %v382 = vadd.f32 %v302, %v374
    %v383 = vadd.f32 %v304, %v375
    %384 = vst [vmem:[#allocation8] sm:$0xff] %v376
    %385 = vst [vmem:[#allocation8 + $0x8] sm:$0xff] %v377
    %386 = vst [vmem:[#allocation8 + $0x10] sm:$0xff] %v378
    %387 = vst [vmem:[#allocation8 + $0x18] sm:$0xff] %v379
    %388 = vst [vmem:[#allocation8 + $0x20] sm:$0xff] %v380
    %389 = vst [vmem:[#allocation8 + $0x28] sm:$0xff] %v381
    %390 = vst [vmem:[#allocation8 + $0x30] sm:$0xff] %v382
    %391 = vst [vmem:[#allocation8 + $0x38] sm:$0xff] %v383
    // Predicated region
    $region22: #{steered_block_forward.1} parent=1 // pred_check
      _
    $region23: #{steered_block_forward.1} parent=1 // pred_check_branch
      %393 = sbr.rel (0) target = $region25
    $region24: #{steered_block_forward.1} parent=1 // pred_region
      %s395 = ssub.s32 1024, 1024
      %396 = vsyncadd [#allocation6], %s395
      %s397 = sshll.u32 [#allocation7], 4
      %s398 = int_to_ptr.vmem [resolvable:$true] %s397
      %403 = dma.vmem_to_hbm [thread:$0]  %s398, 1024, %s5, [#allocation6], 256, 256, 16
    $region25: #{steered_block_forward.1} parent=1 // pred_fallthru
      _
    // Predicated region
    $region26: #{steered_block_forward.1} parent=1 // pred_check
      _
    $region27: #{steered_block_forward.1} parent=1 // pred_check_branch
      %405 = sbr.rel (0) target = $region29
    $region28: #{steered_block_forward.1} parent=1 // pred_region
      %s407 = ssub.s32 1024, 1024
      %408 = vsyncadd [#allocation9], %s407
      %s409 = sshll.u32 [#allocation8], 4
      %s410 = int_to_ptr.vmem [resolvable:$true] %s409
      %415 = dma.vmem_to_hbm [thread:$0]  %s410, 1024, %s6, [#allocation9], 256, 256, 16
    $region29: #{steered_block_forward.1} parent=1 // pred_fallthru
      _
    // Predicated region
    $region30: #{steered_block_forward.1} parent=1 // pred_check
      _
    $region31: #{steered_block_forward.1} parent=1 // pred_check_branch
      %417 = sbr.rel (0) target = $region33
    $region32: #{steered_block_forward.1} parent=1 // pred_region
      %418 = dma.done [#allocation6], 1024
    $region33: #{steered_block_forward.1} parent=1 // pred_fallthru
      _
    // Predicated region
    $region34: #{steered_block_forward.1} parent=1 // pred_check
      _
    $region35: #{steered_block_forward.1} parent=1 // pred_check_branch
      %420 = sbr.rel (0) target = $region37
    $region36: #{steered_block_forward.1} parent=1 // pred_region
      %421 = dma.done [#allocation9], 1024
    $region37: #{steered_block_forward.1} parent=1 // pred_fallthru
      _
    %422 = vsyncpa [#allocation5], 1
    %423 = vsyncpa [#allocation6], 1
    %424 = vsyncpa [#allocation9], 1

</llo_original>
